<compile_context>
chip_gen: v7x
topology: tpu7x:2x2x1
jax: 0.10.0
libtpu: 0.0.40
codegen_flags: <defaults>
</compile_context>

<pallas_src>
import jax
import jax.numpy as jnp
from jax import lax
from jax.experimental import pallas as pl
from jax.experimental.pallas import tpu as pltpu


def _round_up(x, m):
    return ((x + m - 1) // m) * m


def _make_kernel(emit_prob: bool, column_stable: bool, approx_recip: bool):
    def kernel(gat_ref, odn_ref, adj_ref, rst_ref, *maybe_prob):
        gat = gat_ref[...]                                     # [P, 1]   f32 path 'gatEmb'
        odn = odn_ref[...]                                     # [1, Ot]  f32 od 'odNum'
        adj = adj_ref[...].astype(jnp.float32)                 # [P, Ot]  int8 -> f32 0/1 mask

        if column_stable:
            # Exact per-destination-group max subtraction (DGL edge_softmax): P*Ot exps.
            mask = adj != 0.0
            scores = jnp.where(mask, gat, jnp.float32(-1e30))          # [P, Ot]
            col_max = jnp.max(scores, axis=0, keepdims=True)           # [1, Ot]
            expd = jnp.where(mask, jnp.exp(scores - col_max), 0.0)     # [P, Ot]
            denom = jnp.sum(expd, axis=0, keepdims=True)               # [1, Ot]
            denom = jnp.where(denom > 0.0, denom, jnp.float32(1.0))
            inv = pl.reciprocal(denom, approx=approx_recip)            # [1, Ot]
            if emit_prob:
                prob_ref = maybe_prob[0]
                prob_ref[...] = (expd * inv).astype(prob_ref.dtype)
            w = odn * inv                                              # [1, Ot]
            rst_ref[...] = lax.dot_general(                            # [P, 1] tile partial
                expd, w, (((1,), (1,)), ((), ())),
                preferred_element_type=jnp.float32)
        else:
            # Shift-invariant factorization: exp once per path, two MXU mat-vecs over adj.
            gmax = jnp.max(gat, axis=0, keepdims=True)                 # [1, 1]
            e_g = jnp.exp(gat - gmax)                                  # [P, 1]  (P exps)
            denom = lax.dot_general(                                   # [1, Ot] = e_g^T @ adj
                e_g, adj, (((0,), (0,)), ((), ())),
                preferred_element_type=jnp.float32)
            denom = jnp.where(denom > 0.0, denom, jnp.float32(1.0))
            inv = pl.reciprocal(denom, approx=approx_recip)            # [1, Ot]
            if emit_prob:
                prob_ref = maybe_prob[0]
                prob_ref[...] = ((e_g * adj) * inv).astype(prob_ref.dtype)
            w = odn * inv                                              # [1, Ot]
            colsum = lax.dot_general(                                  # [P, 1] = adj @ w^T
                adj, w, (((1,), (1,)), ((), ())),
                preferred_element_type=jnp.float32)
            rst_ref[...] = e_g * colsum                                # [P, 1] tile partial

    return kernel


def od2path_num_forward(gat_emb, od_num, adj, get_select_prob=False, *,
                        o_tile=None, prob_dtype=jnp.float32,
                        column_stable=False, approx_recip=False):
    """gat_emb: [P, 1] path scores; od_num: [O, 1] od demand; adj: [P, O] 0/1 edge mask."""
    P = gat_emb.shape[0]
    O = od_num.shape[0]
    P_pad = _round_up(P, 8)
    O_full = _round_up(O, 128)
    prob_item = jnp.dtype(prob_dtype).itemsize if get_select_prob else 0

    # Lane (od) tile: multiple of 128, largest that fits a conservative VMEM budget.
    if o_tile is None:
        budget = 24 << 20
        per_col = P_pad * (2 * 1 + 8 + 2 * prob_item) + 64   # i8 adj x2, f32 temps, prob x2
        o_tile = max(128, min((budget // per_col) // 128 * 128, 2048))
    else:
        o_tile = max(128, (int(o_tile) // 128) * 128)
    o_tile = min(o_tile, O_full)
    O_pad = _round_up(O, o_tile)
    n_tiles = O_pad // o_tile

    gat = jnp.zeros((P_pad, 1), jnp.float32).at[:P, :].set(
        gat_emb.astype(jnp.float32).reshape(P, 1))
    odn_row = jnp.zeros((1, O_pad), jnp.float32).at[:, :O].set(
        od_num.astype(jnp.float32).reshape(1, O))
    adj_i8 = jnp.zeros((P_pad, O_pad), jnp.int8).at[:P, :O].set(
        (adj != 0).astype(jnp.int8))

    kernel = _make_kernel(get_select_prob, column_stable, approx_recip)

    in_specs = [
        pl.BlockSpec((P_pad, 1), lambda j: (0, 0)),          # gatEmb column (resident)
        pl.BlockSpec((1, o_tile), lambda j: (0, j)),         # odNum row, lane-tiled
        pl.BlockSpec((P_pad, o_tile), lambda j: (0, j)),     # int8 adjacency, lane-tiled
    ]

    # Per-tile partial sums of od2PathNum -> no cross-iteration accumulator, axis stays parallel.
    rst_shape = jax.ShapeDtypeStruct((n_tiles, P_pad, 1), jnp.float32)
    rst_spec = pl.BlockSpec((None, P_pad, 1), lambda j: (j, 0, 0))

    tile_bytes = (2 * P_pad * o_tile * (1 + prob_item)       # double-buffered in/out tiles
                  + 8 * P_pad * o_tile                       # f32 widen + softmax temporaries
                  + 2 * o_tile * 4 + 4 * P_pad * 4)
    vmem_limit = int(min(max(tile_bytes + (8 << 20), 16 << 20), 48 << 20))

    transcendentals = (P_pad * O_pad + O_pad) if column_stable else (n_tiles * P_pad + O_pad)
    cost = pl.CostEstimate(
        flops=10 * P_pad * O_pad,
        transcendentals=transcendentals,
        bytes_accessed=(P_pad * O_pad * (1 + prob_item)
                        + n_tiles * (P_pad + o_tile) * 4 + n_tiles * P_pad * 4),
    )
    cparams = pltpu.CompilerParams(
        dimension_semantics=("parallel",),
        vmem_limit_bytes=vmem_limit,
    )

    if get_select_prob:
        out_shape = (rst_shape, jax.ShapeDtypeStruct((P_pad, O_pad), prob_dtype))
        out_specs = (rst_spec, pl.BlockSpec((P_pad, o_tile), lambda j: (0, j)))
    else:
        out_shape = rst_shape
        out_specs = rst_spec

    # TODO(synk): for very sparse adjacency, feed per-tile nnz counts via
    # pltpu.PrefetchScalarGridSpec and wrap the body in pl.when(nnz > 0) to skip empty od tiles.
    outs = pl.pallas_call(
        kernel,
        grid=(n_tiles,),
        in_specs=in_specs,
        out_specs=out_specs,
        out_shape=out_shape,
        compiler_params=cparams,
        cost_estimate=cost,
    )(gat, odn_row, adj_i8)

    if get_select_prob:
        rst_partials, prob = outs
        rst = jnp.sum(rst_partials, axis=0)[:P, :]
        return rst, prob[:P, :O]
    return jnp.sum(outs, axis=0)[:P, :]


def _reference(gat_emb, od_num, adj):
    """Pure-JAX reference of the same dense formulation (per-column-stable edge_softmax)."""
    mask = adj != 0
    scores = jnp.where(mask, gat_emb.reshape(-1, 1), -1e30)
    col_max = jnp.max(scores, axis=0, keepdims=True)
    expd = jnp.where(mask, jnp.exp(scores - col_max), 0.0)
    denom = jnp.sum(expd, axis=0, keepdims=True)
    prob = expd / jnp.where(denom > 0.0, denom, 1.0)
    rst = jnp.sum(prob * od_num.reshape(1, -1), axis=1, keepdims=True)
    return rst, prob


if __name__ == "__main__":
    P, O = 48, 200  # path nodes, od nodes (small synthetic bipartite graph)

    key = jax.random.PRNGKey(0)
    k1, k2, k3 = jax.random.split(key, 3)

    gat_emb = jax.random.normal(k1, (P, 1), dtype=jnp.float32)             # path 'gatEmb'
    od_num = jax.random.uniform(k2, (O, 1), dtype=jnp.float32) * 10.0      # od 'odNum'
    adj = (jax.random.uniform(k3, (P, O)) < 0.3).astype(jnp.float32)       # select-/select+ pairs
    adj = adj.at[0, :].set(1.0)  # every od node has at least one incoming path edge

    ref_rst, ref_prob = _reference(gat_emb, od_num, adj)

    # 1) Common path: od2PathNum only; selectProb never materialized (auto o_tile, 1 tile).
    rst = jax.block_until_ready(
        od2path_num_forward(gat_emb, od_num, adj, get_select_prob=False))

    # 2) get_selectPro=True path over a multi-tile grid (o_tile=128 -> 2 od tiles).
    rst2, prob = jax.block_until_ready(
        od2path_num_forward(gat_emb, od_num, adj, get_select_prob=True, o_tile=128))

    # 3) Exact per-column-max (DGL-identical) softmax variant.
    rst3, prob3 = jax.block_until_ready(
        od2path_num_forward(gat_emb, od_num, adj, get_select_prob=True,
                            o_tile=128, column_stable=True))

    assert rst.shape == (P, 1) and rst2.shape == (P, 1) and prob.shape == (P, O)
    assert jnp.allclose(rst, ref_rst, rtol=1e-3, atol=1e-3), "rst mismatch (fast, rst-only)"
    assert jnp.allclose(rst2, ref_rst, rtol=1e-3, atol=1e-3), "rst mismatch (fast, prob path)"
    assert jnp.allclose(rst3, ref_rst, rtol=1e-3, atol=1e-3), "rst mismatch (column_stable)"
    assert jnp.allclose(prob, ref_prob, atol=1e-4), "selectProb mismatch (fast)"
    assert jnp.allclose(prob3, ref_prob, atol=1e-4), "selectProb mismatch (column_stable)"
    # softmax columns over existing edges sum to 1
    assert jnp.allclose(jnp.sum(prob, axis=0), jnp.ones((O,)), atol=1e-3)

    print("KERNEL_OK")
</pallas_src>

<mosaic_0001>
module attributes {stable_mosaic.version = 11 : i64} {
  func.func @kernel(%arg0: i32, %arg1: memref<48x1xf32, #tpu.memory_space<vmem>>, %arg2: memref<1x256xf32, #tpu.memory_space<vmem>>, %arg3: memref<48x256xi8, #tpu.memory_space<vmem>>, %arg4: memref<1x48x1xf32, #tpu.memory_space<vmem>>) attributes {dimension_semantics = [#tpu.dimension_semantics<parallel>], iteration_bounds = array<i64: 1>, scalar_prefetch = 0 : i64, scratch_operands = 0 : i64, tpu.core_type = #tpu.core_type<tc>, window_params = [{pipeline_mode = #tpu.pipeline_mode<synchronous>, transform_indices = @transform_0, window_bounds = array<i64: 48, 1>}, {transform_indices = @transform_1, window_bounds = array<i64: 1, 256>}, {transform_indices = @transform_2, window_bounds = array<i64: 48, 256>}, {transform_indices = @transform_3, window_bounds = array<i64: 1, 48, 1>}]} {
    %c0 = arith.constant 0 : index
    %c0_0 = arith.constant 0 : index
    %0 = vector.load %arg1[%c0, %c0_0] : memref<48x1xf32, #tpu.memory_space<vmem>>, vector<48x1xf32>
    %c0_1 = arith.constant 0 : index
    %c0_2 = arith.constant 0 : index
    %1 = vector.load %arg2[%c0_1, %c0_2] : memref<1x256xf32, #tpu.memory_space<vmem>>, vector<1x256xf32>
    %c0_3 = arith.constant 0 : index
    %c0_4 = arith.constant 0 : index
    %2 = vector.load %arg3[%c0_3, %c0_4] : memref<48x256xi8, #tpu.memory_space<vmem>>, vector<48x256xi8>
    %3 = arith.sitofp %2 : vector<48x256xi8> to vector<48x256xf32>
    %cst = arith.constant dense<0xFF800000> : vector<1xf32>
    %4 = vector.multi_reduction <maximumf>, %0, %cst [0] : vector<48x1xf32> to vector<1xf32>
    %5 = vector.shape_cast %4 : vector<1xf32> to vector<1x1xf32>
    %6 = vector.broadcast %5 : vector<1x1xf32> to vector<48x1xf32>
    %7 = arith.subf %0, %6 : vector<48x1xf32>
    %8 = math.exp %7 : vector<48x1xf32>
    %cst_5 = arith.constant dense<0.000000e+00> : vector<1x256xf32>
    %9 = tpu.matmul %8, %3, %cst_5 {dimension_numbers = #tpu.dot_dimension_numbers<[0], [0], [1], [1], [0, 1, 1, 1], [], []>} : vector<48x1xf32>, vector<48x256xf32>, vector<1x256xf32> -> vector<1x256xf32>
    %cst_6 = arith.constant 0.000000e+00 : f32
    %10 = vector.broadcast %cst_6 : f32 to vector<1x256xf32>
    %11 = arith.cmpf ogt, %9, %10 : vector<1x256xf32>
    %cst_7 = arith.constant 1.000000e+00 : f32
    %12 = vector.broadcast %cst_7 : f32 to vector<1x256xf32>
    %13 = arith.select %11, %9, %12 : vector<1x256xi1>, vector<1x256xf32>
    %14 = tpu.reciprocal %13 : vector<1x256xf32> -> vector<1x256xf32>
    %15 = arith.mulf %1, %14 : vector<1x256xf32>
    %cst_8 = arith.constant dense<0.000000e+00> : vector<48x1xf32>
    %16 = tpu.matmul %3, %15, %cst_8 {dimension_numbers = #tpu.dot_dimension_numbers<[1], [1], [0], [0], [0, 0, 1, 0], [], []>} : vector<48x256xf32>, vector<1x256xf32>, vector<48x1xf32> -> vector<48x1xf32>
    %17 = arith.mulf %8, %16 : vector<48x1xf32>
    %c0_9 = arith.constant 0 : index
    %c0_10 = arith.constant 0 : index
    %c0_11 = arith.constant 0 : index
    %18 = vector.load %arg4[%c0_9, %c0_10, %c0_11] : memref<1x48x1xf32, #tpu.memory_space<vmem>>, vector<1x48x1xf32>
    %19 = vector.shape_cast %18 : vector<1x48x1xf32> to vector<48x1xf32>
    %20 = vector.shape_cast %17 : vector<48x1xf32> to vector<1x48x1xf32>
    tpu.vector_store %arg4[%c0_9, %c0_10, %c0_11], %20 {strides = array<i32>} : memref<1x48x1xf32, #tpu.memory_space<vmem>>, vector<1x48x1xf32>,
    return
  }
  func.func @transform_0(%arg0: i32) -> (i32, i32) {
    %c0_i32 = arith.constant 0 : i32
    %c0_i32_0 = arith.constant 0 : i32
    %c0_i32_1 = arith.constant 0 : i32
    return %c0_i32, %c0_i32_0 : i32, i32
  }
  func.func @transform_1(%arg0: i32) -> (i32, i32) {
    %c0_i32 = arith.constant 0 : i32
    %c0_i32_0 = arith.constant 0 : i32
    return %c0_i32, %arg0 : i32, i32
  }
  func.func @transform_2(%arg0: i32) -> (i32, i32) {
    %c0_i32 = arith.constant 0 : i32
    %c0_i32_0 = arith.constant 0 : i32
    return %c0_i32, %arg0 : i32, i32
  }
  func.func @transform_3(%arg0: i32) -> (i32, i32, i32) {
    %c0_i32 = arith.constant 0 : i32
    %c0_i32_0 = arith.constant 0 : i32
    %c0_i32_1 = arith.constant 0 : i32
    return %arg0, %c0_i32, %c0_i32_0 : i32, i32, i32
  }
}

</mosaic_0001>

<llo_original>
// kernel: tpu_custom_call.1
$region0: #{tpu_custom_call.1}
  #allocation0 [shape = 'u32[]', space=smem, size = 0x4, offset = 0x4, fixed_abs, tag = 'smem constant byte address 0x4 - core index']
  #allocation1 [shape = 'u32[144,128]{1,0:T(1,128)}', space=vmem, size = 0x12000, scoped, tag = 'internal scratch']
  %s0 = inlined_call_operand.vmem [shape: f32[48,1], index: 0, kind: input, shape index: {}]
  %s1 = inlined_call_operand.vmem [shape: f32[1,256], index: 1, kind: input, shape index: {}]
  %s2 = inlined_call_operand.vmem [shape: s8[48,256], index: 2, kind: input, shape index: {}]
  %s3 = inlined_call_operand.vmem [shape: f32[1,48,1], index: 3, kind: output, shape index: {}]
  %s4 = sld [smem:[#allocation0]]
  $region22: #{tpu_custom_call.1} parent=0
    _
  %s6 = ssub.s32 1, %s4
  %s7 = scalar_select 0, %s6, %s4
  // Predicated region
  $region2: #{tpu_custom_call.1} parent=0 // pred_check
    _
  $region3: #{tpu_custom_call.1} parent=0 // pred_check_branch
    %9 = sbr.rel (0) target = $region5
  $region4: #{tpu_custom_call.1} parent=0 // pred_region
    _
  $region5: #{tpu_custom_call.1} parent=0 // pred_fallthru
    _
  // Predicated region
  $region6: #{tpu_custom_call.1} parent=0 // pred_check
    _
  $region7: #{tpu_custom_call.1} parent=0 // pred_check_branch
    %11 = sbr.rel (0) target = $region9
  $region8: #{tpu_custom_call.1} parent=0 // pred_region
    _
  $region9: #{tpu_custom_call.1} parent=0 // pred_fallthru
    _
  // Predicated region
  $region10: #{tpu_custom_call.1} parent=0 // pred_check
    _
  $region11: #{tpu_custom_call.1} parent=0 // pred_check_branch
    %13 = sbr.rel (0) target = $region13
  $region12: #{tpu_custom_call.1} parent=0 // pred_region
    _
  $region13: #{tpu_custom_call.1} parent=0 // pred_fallthru
    _
  %v14 = vld [vmem:[%s0] sm:$0xff]
  %v15 = vld [vmem:[%s0 + $0x8] sm:$0xff]
  %v16 = vld [vmem:[%s0 + $0x10] sm:$0xff]
  %v17 = vld [vmem:[%s0 + $0x18] sm:$0xff]
  %v18 = vld [vmem:[%s0 + $0x20] sm:$0xff]
  %v19 = vld [vmem:[%s0 + $0x28] sm:$0xff]
  %v20 = vld [vmem:[%s1] sm:$0x3]
  %v21 = vld [vmem:[%s2] sm:$0xf]
  %v22 = vld [vmem:[%s2 + $0x4] sm:$0xf]
  %v23 = vld [vmem:[%s2 + $0x8] sm:$0xf]
  %v24 = vld [vmem:[%s2 + $0xc] sm:$0xf]
  %v25 = vld [vmem:[%s2 + $0x10] sm:$0xf]
  %v26 = vld [vmem:[%s2 + $0x14] sm:$0xf]
  %v27 = vunpack.c.0.s8 %v21
  %v28 = vunpack.c.1.s8 %v21
  %v29 = vunpack.c.0.s8 %v22
  %v30 = vunpack.c.1.s8 %v22
  %v31 = vunpack.c.0.s8 %v23
  %v32 = vunpack.c.1.s8 %v23
  %v33 = vunpack.c.0.s8 %v24
  %v34 = vunpack.c.1.s8 %v24
  %v35 = vunpack.c.0.s8 %v25
  %v36 = vunpack.c.1.s8 %v25
  %v37 = vunpack.c.0.s8 %v26
  %v38 = vunpack.c.1.s8 %v26
  %v39 = vcvt.s32.f32 %v27
  %v40 = vcvt.s32.f32 %v28
  %v41 = vcvt.s32.f32 %v29
  %v42 = vcvt.s32.f32 %v30
  %v43 = vcvt.s32.f32 %v31
  %v44 = vcvt.s32.f32 %v32
  %v45 = vcvt.s32.f32 %v33
  %v46 = vcvt.s32.f32 %v34
  %v47 = vcvt.s32.f32 %v35
  %v48 = vcvt.s32.f32 %v36
  %v49 = vcvt.s32.f32 %v37
  %v50 = vcvt.s32.f32 %v38
  %vm51 = vcmask 7168
  %v52 = vsel %vm51, %v14, -inf
  %v53 = vsel %vm51, %v15, -inf
  %v54 = vsel %vm51, %v16, -inf
  %v55 = vsel %vm51, %v17, -inf
  %v56 = vsel %vm51, %v18, -inf
  %v57 = vmax.f32 %v52, %v56
  %v58 = vsel %vm51, %v19, -inf
  %v59 = vmax.f32 %v53, %v58
  %v60 = vmax.f32 %v57, %v59
  %v61 = vmax.f32 %v54, %v55
  %v62 = vmax.f32 %v60, %v61
  %v63 = vrot.slane %v62, 4
  %v64 = vmax.f32 %v62, %v63
  %v65 = vrot.slane %v64, 2
  %v66 = vmax.f32 %v64, %v65
  %v67 = vrot.slane %v66, 1
  %v68 = vmax.f32 %v66, %v67
  %v69 = vsub.f32 %v14, %v68
  %v70 = vsub.f32 %v15, %v68
  %v71 = vsub.f32 %v16, %v68
  %v72 = vsub.f32 %v17, %v68
  %v73 = vsub.f32 %v18, %v68
  %v74 = vsub.f32 %v19, %v68
  %v75 = vmul.f32 %v69, 1.442695
  %v76 = vpow.pop %v75
  %v77 = vmul.f32 %v70, 1.442695
  %v78 = vpow.pop %v77
  %v79 = vmul.f32 %v71, 1.442695
  %v80 = vpow.pop %v79
  %v81 = vmul.f32 %v72, 1.442695
  %v82 = vpow.pop %v81
  %v83 = vmul.f32 %v73, 1.442695
  %v84 = vpow.pop %v83
  %v85 = vmul.f32 %v74, 1.442695
  %v86 = vpow.pop %v85
  %87 = vxpose.xlu0.b32.start [1/16] %v76, 128
  %88 = vxpose.xlu0.b32.cont [2/16] %v78, 128
  %89 = vxpose.xlu0.b32.cont [3/16] %v80, 128
  %90 = vxpose.xlu0.b32.cont [4/16] %v82, 128
  %91 = vxpose.xlu0.b32.cont [5/16] %v84, 128
  %92 = vxpose.xlu0.b32.cont [6/16] %v86, 128
  %93 = vxpose.xlu0.b32.cont [7/16] 0.0, 128
  %94 = vxpose.xlu0.b32.cont [8/16] 0.0, 128
  %95 = vxpose.xlu0.b32.cont [9/16] 0.0, 128
  %96 = vxpose.xlu0.b32.cont [10/16] 0.0, 128
  %97 = vxpose.xlu0.b32.cont [11/16] 0.0, 128
  %98 = vxpose.xlu0.b32.cont [12/16] 0.0, 128
  %99 = vxpose.xlu0.b32.cont [13/16] 0.0, 128
  %100 = vxpose.xlu0.b32.cont [14/16] 0.0, 128
  %101 = vxpose.xlu0.b32.cont [15/16] 0.0, 128
  %102 = vxpose.xlu0.b32.end [16/16] 0.0, 128
  %v103 = vpop.trf.xlu0
  %v104 = vpop.trf.xlu0
  %v105 = vpop.trf.xlu0
  %v106 = vpop.trf.xlu0
  %v107 = vpop.trf.xlu0
  %v108 = vpop.trf.xlu0
  %v109 = vpop.trf.xlu0
  %v110 = vpop.trf.xlu0
  %v111 = vpop.trf.xlu0
  %v112 = vpop.trf.xlu0
  %v113 = vpop.trf.xlu0
  %v114 = vpop.trf.xlu0
  %v115 = vpop.trf.xlu0
  %v116 = vpop.trf.xlu0
  %v117 = vpop.trf.xlu0
  %v118 = vpop.trf.xlu0
  %vm119 = vcmask 392192
  %v121 = vsel %vm119, %v103, 0
  %123 = vmatprep.subr.mxu0 %v40
  %124 = vmatpush1.msra.mxu0 %v39
  %125 = vmatprep.subr.mxu0 %v42
  %126 = vmatpush1.msra.mxu0 %v41
  %127 = vmatprep.subr.mxu0 %v44
  %128 = vmatpush1.msra.mxu0 %v43
  %129 = vmatprep.subr.mxu0 %v46
  %130 = vmatpush1.msra.mxu0 %v45
  %131 = vmatprep.subr.mxu0 %v48
  %132 = vmatpush1.msra.mxu0 %v47
  %133 = vmatprep.subr.mxu0 %v50
  %134 = vmatpush1.msra.mxu0 %v49
  %135 = vmatprep.subr.mxu0 0.0
  %136 = vmatpush1.msra.mxu0 0.0
  %137 = vmatprep.subr.mxu0 0.0
  %138 = vmatpush1.msra.mxu0 0.0
  %139 = vmatprep.subr.mxu0 0.0
  %140 = vmatpush1.msra.mxu0 0.0
  %141 = vmatprep.subr.mxu0 0.0
  %142 = vmatpush1.msra.mxu0 0.0
  %143 = vmatprep.subr.mxu0 0.0
  %144 = vmatpush1.msra.mxu0 0.0
  %145 = vmatprep.subr.mxu0 0.0
  %146 = vmatpush1.msra.mxu0 0.0
  %147 = vmatprep.subr.mxu0 0.0
  %148 = vmatpush1.msra.mxu0 0.0
  %149 = vmatprep.subr.mxu0 0.0
  %150 = vmatpush1.msra.mxu0 0.0
  %151 = vmatprep.subr.mxu0 0.0
  %152 = vmatpush1.msra.mxu0 0.0
  %153 = vmatprep.subr.mxu0 0.0
  %154 = vmatpush1.msra.mxu0 0.0
  %155 = vmatprep.subr.mxu0 0.0
  %156 = vmatpush1.msra.mxu0 0.0
  %157 = vmatprep.subr.mxu0 0.0
  %158 = vmatpush1.msra.mxu0 0.0
  %159 = vmatprep.subr.mxu0 0.0
  %160 = vmatpush1.msra.mxu0 0.0
  %161 = vmatprep.subr.mxu0 0.0
  %162 = vmatpush1.msra.mxu0 0.0
  %163 = vmatprep.subr.mxu0 0.0
  %164 = vmatpush1.msra.mxu0 0.0
  %165 = vmatprep.subr.mxu0 0.0
  %166 = vmatpush1.msra.mxu0 0.0
  %167 = vmatprep.subr.mxu0 0.0
  %168 = vmatpush1.msra.mxu0 0.0
  %169 = vmatprep.subr.mxu0 0.0
  %170 = vmatpush1.msra.mxu0 0.0
  %171 = vmatprep.subr.mxu0 0.0
  %172 = vmatpush1.msra.mxu0 0.0
  %173 = vmatprep.subr.mxu0 0.0
  %174 = vmatpush1.msra.mxu0 0.0
  %175 = vmatprep.subr.mxu0 0.0
  %176 = vmatpush1.msra.mxu0 0.0
  %177 = vmatprep.subr.mxu0 0.0
  %178 = vmatpush1.msra.mxu0 0.0
  %179 = vmatprep.subr.mxu0 0.0
  %180 = vmatpush1.msra.mxu0 0.0
  %181 = vmatprep.subr.mxu0 0.0
  %182 = vmatpush1.msra.mxu0 0.0
  %183 = vmatprep.subr.mxu0 0.0
  %184 = vmatpush1.msra.mxu0 0.0
  %185 = vmatprep.subr.mxu0 0.0
  %186 = vmatpush1.msra.mxu0 0.0
  %187 = vmatprep.mubr.f32.mxu0 0.0
  %188 = vmatmul.mubr.f32.gmra.mrb[0].mxu0 %v121
  %v189 = vpop.f32.mrb[0].mxu0
  %v190 = vadd.f32 0.0, %v189
  %v191 = vpop.f32.mrb[0].mxu0
  %v192 = vadd.f32 0.0, %v191
  %193 = vdwg.mxu0
  %vm194 = vcmp.gt.f32.partialorder %v190, 0.0
  %vm195 = vcmp.gt.f32.partialorder %v192, 0.0
  %v196 = vsel %vm194, %v190, 1.0
  %v197 = vsel %vm195, %v192, 1.0
  %v198 = vrcp.pop %v196
  %v199 = vrcp.pop %v197
  %v202 = vcombine.low %v198, %v199
  %v204 = vunpack.c.l.s4 1966171168
  %v205 = vunpack.c.0.s8 %v204
  %v206 = vlaneseq
  %v207 = vshrl.u32 %v206, 7
  %v208 = vsub.s32 %v205, %v207
  %v209 = vrot.slane %v202, %v208
  %v211 = vunpack.c.l.s4 1966171168
  %v212 = vunpack.c.0.s8 %v211
  %v213 = vlaneseq
  %v214 = vshrl.u32 %v213, 7
  %v215 = vsub.s32 %v212, %v214
  %v216 = vrot.slane %v209, %v215
  %v218 = vmul.f32 %v20, %v216
  %v220 = vlaneseq
  %v221 = vshrl.u32 %v220, 7
  %v222 = vsub.s32 0, %v221
  %v223 = vrot.slane %v218, %v222
  %v224 = vlaneseq
  %v225 = vshrl.u32 %v224, 7
  %v226 = vsub.s32 1, %v225
  %v227 = vrot.slane %v218, %v226
  %v230 = vmul.f32 %v39, %v223
  %v231 = vmul.f32 %v40, %v227
  %v232 = vmul.f32 %v41, %v223
  %v233 = vmul.f32 %v42, %v227
  %v234 = vmul.f32 %v43, %v223
  %v235 = vmul.f32 %v44, %v227
  %v236 = vmul.f32 %v45, %v223
  %v237 = vmul.f32 %v46, %v227
  %v238 = vmul.f32 %v47, %v223
  %v239 = vmul.f32 %v48, %v227
  %v240 = vmul.f32 %v49, %v223
  %v241 = vmul.f32 %v50, %v227
  %v242 = vadd.f32 %v230, %v231
  %243 = vadd.xlane.f32.xlu0 %v242
  %v244 = vpop.xlane.xlu0 %243
  %v245 = vadd.f32 %v232, %v233
  %246 = vadd.xlane.f32.xlu0 %v245
  %v247 = vpop.xlane.xlu0 %246
  %v248 = vadd.f32 %v234, %v235
  %249 = vadd.xlane.f32.xlu0 %v248
  %v250 = vpop.xlane.xlu0 %249
  %v251 = vadd.f32 %v236, %v237
  %252 = vadd.xlane.f32.xlu0 %v251
  %v253 = vpop.xlane.xlu0 %252
  %v254 = vadd.f32 %v238, %v239
  %255 = vadd.xlane.f32.xlu0 %v254
  %v256 = vpop.xlane.xlu0 %255
  %v257 = vadd.f32 %v240, %v241
  %258 = vadd.xlane.f32.xlu0 %v257
  %v259 = vpop.xlane.xlu0 %258
  %v260 = vmul.f32 %v76, %v244
  %v261 = vmul.f32 %v78, %v247
  %v262 = vmul.f32 %v80, %v250
  %v263 = vmul.f32 %v82, %v253
  %v264 = vmul.f32 %v84, %v256
  %v265 = vmul.f32 %v86, %v259
  %266 = vst.msk [vmem:[%s3] sm:$0xff] %vm51, %v260
  %267 = vst.msk [vmem:[%s3 + $0x8] sm:$0xff] %vm51, %v261
  %268 = vst.msk [vmem:[%s3 + $0x10] sm:$0xff] %vm51, %v262
  %269 = vst.msk [vmem:[%s3 + $0x18] sm:$0xff] %vm51, %v263
  %270 = vst.msk [vmem:[%s3 + $0x20] sm:$0xff] %vm51, %v264
  %271 = vst.msk [vmem:[%s3 + $0x28] sm:$0xff] %vm51, %v265
  // Predicated region
  $region14: #{tpu_custom_call.1} parent=0 // pred_check
    _
  $region15: #{tpu_custom_call.1} parent=0 // pred_check_branch
    %273 = sbr.rel (0) target = $region17
  $region16: #{tpu_custom_call.1} parent=0 // pred_region
    _
  $region17: #{tpu_custom_call.1} parent=0 // pred_fallthru
    _
  // Predicated region
  $region18: #{tpu_custom_call.1} parent=0 // pred_check
    _
  $region19: #{tpu_custom_call.1} parent=0 // pred_check_branch
    %275 = sbr.rel (0) target = $region21
  $region20: #{tpu_custom_call.1} parent=0 // pred_region
    _
  $region21: #{tpu_custom_call.1} parent=0 // pred_fallthru
    _

</llo_original>
